<compile_context>
chip_gen: v5e
topology: v5e:2x2
jax: 0.10.0
libtpu: 0.0.40
codegen_flags: <defaults>
</compile_context>

<pallas_src>
import math

import jax
import jax.numpy as jnp
from jax.experimental import pallas as pl
from jax.experimental.pallas import tpu as pltpu


VMEM_LIMIT_BYTES = 32 * 1024 * 1024
NUM_CLASSES = 10

# (cin, cout, stride) for conv1..conv13 DepthSepConv blocks.
DS_CFG = [
    (32, 64, 1), (64, 128, 2), (128, 128, 1), (128, 256, 2), (256, 256, 1),
    (256, 512, 2), (512, 512, 1), (512, 512, 1), (512, 512, 1), (512, 512, 1),
    (512, 512, 1), (512, 1024, 2), (1024, 1024, 1),
]


def _round_up(x, m):
    return ((x + m - 1) // m) * m


# ----------------------------------------------------------------------------
# Pallas kernels
# ----------------------------------------------------------------------------

def _matmul_bias_relu6_kernel(x_ref, w_ref, b_ref, o_ref):
    # x: [tm, 128] bf16, w: [128, 128] bf16 (BN scale folded), b: [1, 128] f32
    y = jnp.dot(x_ref[...], w_ref[...], preferred_element_type=jnp.float32)
    y = y + b_ref[...]
    o_ref[...] = jnp.clip(y, 0.0, 6.0).astype(o_ref.dtype)


def _make_dsconv_kernel(stride, chunk, Wk, Hq, Cin):
    """Fused depthwise-3x3 + bias + ReLU6 + pointwise-1x1 + bias + ReLU6.

    The input ref holds one whole padded image, flattened to [rows, Cin]
    (stride-2: 4 space-to-depth parity planes stacked along rows, each plane
    Hq x Wk).  Each grid step computes `chunk` output rows of width Wk
    (columns >= Wo are garbage and sliced off by the wrapper).
    """
    L = chunk * Wk

    def kernel(x_ref, dww_ref, dwb_ref, pww_ref, pwb_ref, o_ref):
        ro = pl.program_id(1) * chunk          # first output row of this chunk
        W9 = dww_ref[...]                      # (9, Cin) f32, BN scale folded
        dwb = dwb_ref[...]                     # (1, Cin) f32

        def tap(k):
            ki, kj = divmod(k, 3)
            if stride == 1:
                start = (ro + ki) * Wk + kj
            else:
                p, dr = ki % 2, ki // 2
                q, dc = kj % 2, kj // 2
                start = ((2 * p + q) * Hq + ro + dr) * Wk + dc
            v = x_ref[pl.ds(start, L), :]                      # (L, Cin) bf16
            return v.astype(jnp.float32) * W9[k].reshape(1, Cin)

        # 3 independent accumulation chains for VALU ILP (f32: safe on v5e).
        acc0 = tap(0)
        acc1 = tap(1)
        acc2 = tap(2)
        acc0 = acc0 + tap(3)
        acc1 = acc1 + tap(4)
        acc2 = acc2 + tap(5)
        acc0 = acc0 + tap(6)
        acc1 = acc1 + tap(7)
        acc2 = acc2 + tap(8)
        dw = (acc0 + acc1) + acc2 + dwb
        dw = jnp.clip(dw, 0.0, 6.0).astype(jnp.bfloat16)       # (L, Cin)

        # Pointwise 1x1 conv on the MXU (bf16 x bf16 -> f32) + bias + ReLU6.
        y = jnp.dot(dw, pww_ref[...], preferred_element_type=jnp.float32)
        y = y + pwb_ref[...]
        o_ref[...] = jnp.clip(y, 0.0, 6.0).astype(o_ref.dtype)

    return kernel


def _fc_softmax_kernel(x_ref, w_ref, b_ref, o_ref):
    logits = jnp.dot(x_ref[...], w_ref[...], preferred_element_type=jnp.float32)
    logits = logits + b_ref[...]
    m = jnp.max(logits, axis=-1, keepdims=True)
    e = jnp.exp(logits - m)
    o_ref[...] = e / jnp.sum(e, axis=-1, keepdims=True)


# ----------------------------------------------------------------------------
# Pallas wrappers
# ----------------------------------------------------------------------------

def matmul_bias_relu6(x2d, w, bias, row_tile=1024):
    """conv0 GEMM + bias + ReLU6 on lane-packed [M, 128] operands."""
    M, K = x2d.shape
    C = w.shape[1]
    tm = min(row_tile, _round_up(M, 8))
    M_pad = _round_up(M, tm)
    if M_pad != M:
        x2d = jnp.pad(x2d, ((0, M_pad - M), (0, 0)))
    out = pl.pallas_call(
        _matmul_bias_relu6_kernel,
        out_shape=jax.ShapeDtypeStruct((M_pad, C), jnp.bfloat16),
        grid=(M_pad // tm,),
        in_specs=[
            pl.BlockSpec((tm, K), lambda i: (i, 0)),
            pl.BlockSpec((K, C), lambda i: (0, 0)),
            pl.BlockSpec((1, C), lambda i: (0, 0)),
        ],
        out_specs=pl.BlockSpec((tm, C), lambda i: (i, 0)),
        compiler_params=pltpu.CompilerParams(
            dimension_semantics=("parallel",),
            vmem_limit_bytes=VMEM_LIMIT_BYTES),
    )(x2d, w, bias)
    return out[:M]


def _pick_chunk(Ho, Wk, cmax):
    # Keep the f32 intermediate around ~2 MB, and give >=2 grid steps per
    # image when possible (v7x dual TensorCore / pipelining).
    target_rows = min(2048, max(128, (2 * 1024 * 1024) // (4 * cmax)))
    chunk = max(1, target_rows // Wk)
    if Ho >= 2:
        chunk = max(1, min(chunk, -(-Ho // 2)))
    else:
        chunk = 1
    return chunk


def ds_conv_block(x, blk, stride):
    """x: [N, H, W, Cin] bf16 -> [N, Ho, Wo, Cout] bf16 (fused DW+PW)."""
    N, H, W, Cin = x.shape
    Cout = blk["pw_w"].shape[1]
    Ho = (H - 1) // stride + 1
    Wo = (W - 1) // stride + 1

    # Kernel "width" (multiple of 8 so every block sublane dim is aligned).
    Wk = _round_up(Wo + (2 if stride == 1 else 1), 8)
    chunk = _pick_chunk(Ho, Wk, max(Cin, Cout))
    n_chunks = -(-Ho // chunk)
    Ho_pad = n_chunks * chunk
    L = chunk * Wk

    if stride == 1:
        Hp = Ho_pad + 3
        xpad = jnp.pad(x, ((0, 0), (1, Hp - H - 1), (1, Wk - W - 1), (0, 0)))
        xin = xpad.reshape(N * Hp * Wk, Cin)
        rows_img = Hp * Wk
        Hq = Hp
    else:
        Hq = Ho_pad + 2
        xpad = jnp.pad(
            x, ((0, 0), (1, 2 * Hq - H - 1), (1, 2 * Wk - W - 1), (0, 0)))
        # space-to-depth: 4 parity planes (p, q) stacked along rows.
        xin = xpad.reshape(N, Hq, 2, Wk, 2, Cin)
        xin = xin.transpose(0, 2, 4, 1, 3, 5)
        xin = xin.reshape(N * 4 * Hq * Wk, Cin)
        rows_img = 4 * Hq * Wk

    xin = xin.astype(jnp.bfloat16)
    kernel = _make_dsconv_kernel(stride, chunk, Wk, Hq, Cin)

    out = pl.pallas_call(
        kernel,
        out_shape=jax.ShapeDtypeStruct((N * Ho_pad * Wk, Cout), jnp.bfloat16),
        grid=(N, n_chunks),
        in_specs=[
            pl.BlockSpec((rows_img, Cin), lambda n, c: (n, 0)),   # whole image
            pl.BlockSpec((9, Cin), lambda n, c: (0, 0)),
            pl.BlockSpec((1, Cin), lambda n, c: (0, 0)),
            pl.BlockSpec((Cin, Cout), lambda n, c: (0, 0)),
            pl.BlockSpec((1, Cout), lambda n, c: (0, 0)),
        ],
        out_specs=pl.BlockSpec(
            (L, Cout), lambda n, c, nc=n_chunks: (n * nc + c, 0)),
        compiler_params=pltpu.CompilerParams(
            dimension_semantics=("parallel", "parallel"),
            vmem_limit_bytes=VMEM_LIMIT_BYTES),
    )(xin, blk["dw_w"], blk["dw_bias"], blk["pw_w"], blk["pw_bias"])

    out = out.reshape(N, Ho_pad, Wk, Cout)[:, :Ho, :Wo, :]
    return out


def fc_softmax(x, w, b):
    """Fused Linear + Softmax(dim=1).  Tiny head, whole arrays in VMEM."""
    N = x.shape[0]
    C = w.shape[1]
    vmem = pl.BlockSpec(memory_space=pltpu.MemorySpace.VMEM)
    return pl.pallas_call(
        _fc_softmax_kernel,
        out_shape=jax.ShapeDtypeStruct((N, C), jnp.float32),
        in_specs=[vmem, vmem, vmem],
        out_specs=vmem,
        compiler_params=pltpu.CompilerParams(
            vmem_limit_bytes=VMEM_LIMIT_BYTES),
    )(x, w, b)


# ----------------------------------------------------------------------------
# JAX glue: im2col for conv0 only (3 input channels)
# ----------------------------------------------------------------------------

def im2col_3x3(x, stride):
    """x: [N, H, W, C] -> patches [N*Ho*Wo, 9*C] in (ki, kj, c) order."""
    N, H, W, C = x.shape
    Ho = (H - 1) // stride + 1
    Wo = (W - 1) // stride + 1
    xp = jnp.pad(x, ((0, 0), (1, 1), (1, 1), (0, 0)))
    taps = []
    for ki in range(3):
        for kj in range(3):
            taps.append(
                xp[:, ki:ki + stride * (Ho - 1) + 1:stride,
                   kj:kj + stride * (Wo - 1) + 1:stride, :])
    patches = jnp.stack(taps, axis=3)            # [N, Ho, Wo, 9, C]
    return patches.reshape(N * Ho * Wo, 9 * C), Ho, Wo


# ----------------------------------------------------------------------------
# Model definition (inference-mode, folded BatchNorm)
# ----------------------------------------------------------------------------

def init_params(key, num_classes=NUM_CLASSES):
    keys = iter(jax.random.split(key, 128))

    def nrm(shape, scale):
        return (scale * jax.random.normal(next(keys), shape)).astype(jnp.float32)

    def bn(c):
        scale = 1.0 + 0.1 * jax.random.normal(next(keys), (1, c)).astype(jnp.float32)
        bias = 0.1 * jax.random.normal(next(keys), (1, c)).astype(jnp.float32)
        return scale, bias

    p = {}
    # conv0: 3x3, 3 -> 32, stride 2.  im2col weight [27, 32] (ki,kj,cin order),
    # BN scale folded in, K padded to 32, then packed block-diagonally so the
    # GEMM runs with K = N = 128 (dense 128-lane stores).
    w0 = nrm((27, 32), 1.0 / math.sqrt(27.0))
    s0, b0 = bn(32)
    w0 = jnp.pad(w0 * s0, ((0, 5), (0, 0)))                  # (32, 32)
    wblk = jnp.zeros((128, 128), jnp.float32)
    for i in range(4):
        wblk = wblk.at[32 * i:32 * (i + 1), 32 * i:32 * (i + 1)].set(w0)
    p["conv0_w"] = wblk.astype(jnp.bfloat16)
    p["conv0_bias"] = jnp.tile(b0, (1, 4))                   # (1, 128) f32

    blocks = []
    for cin, cout, _s in DS_CFG:
        blk = {}
        dw = nrm((9, cin), 1.0 / 3.0)
        dsc, dbi = bn(cin)
        blk["dw_w"] = dw * dsc                               # f32, scale folded
        blk["dw_bias"] = dbi                                 # (1, cin) f32
        pw = nrm((cin, cout), 1.0 / math.sqrt(cin))
        psc, pbi = bn(cout)
        blk["pw_w"] = (pw * psc).astype(jnp.bfloat16)        # scale folded
        blk["pw_bias"] = pbi                                 # (1, cout) f32
        blocks.append(blk)
    p["blocks"] = blocks

    p["fc_w"] = nrm((1024, num_classes), 1.0 / math.sqrt(1024.0))
    p["fc_b"] = nrm((1, num_classes), 0.1)
    return p


def forward(params, x_nchw):
    """x_nchw: [N, 3, H, W] float32 -> softmax probs [N, num_classes]."""
    x = jnp.transpose(x_nchw, (0, 2, 3, 1)).astype(jnp.bfloat16)   # NHWC bf16
    N = x.shape[0]

    # conv0 + (folded) BN + ReLU6 via lane-packed im2col GEMM.
    patches, Ho, Wo = im2col_3x3(x, stride=2)                # [M, 27] bf16
    M = patches.shape[0]
    patches = jnp.pad(patches, ((0, (-M) % 4), (0, 5)))      # K 27->32, M->4k
    M4 = patches.shape[0]
    packed = patches.reshape(M4 // 4, 128)                   # free row-major
    y = matmul_bias_relu6(packed, params["conv0_w"], params["conv0_bias"])
    x = y.reshape(M4, 32)[:M].reshape(N, Ho, Wo, 32)

    # conv1 .. conv13: fused DepthSepConv blocks (taps built in VMEM).
    for blk, (_cin, _cout, stride) in zip(params["blocks"], DS_CFG):
        x = ds_conv_block(x, blk, stride)

    # AvgPool2d(kernel_size=1, stride=10): 1x1 window average == strided pick.
    x = x[:, ::10, ::10, :]

    # PyTorch x.view(N, -1) flattens NCHW order -> transpose back first.
    x = jnp.transpose(x, (0, 3, 1, 2)).reshape(N, -1)
    assert x.shape[1] == 1024, (
        "flattened feature width %d != fc in_features 1024 (input resolution "
        "incompatible with the fixed Linear(1024, num_classes))" % x.shape[1])

    return fc_softmax(x.astype(jnp.float32), params["fc_w"], params["fc_b"])


# ----------------------------------------------------------------------------

if __name__ == "__main__":
    key = jax.random.PRNGKey(0)
    pkey, xkey = jax.random.split(key)

    params = init_params(pkey, NUM_CLASSES)
    # Small input consistent with the module (3-channel NCHW image); spatial 32
    # keeps all stride-2 stages valid and ends at 1x1 like the 300x300 case.
    x = jax.random.normal(xkey, (2, 3, 32, 32), dtype=jnp.float32)

    out = forward(params, x)
    out = jax.block_until_ready(out)

    assert out.shape == (2, NUM_CLASSES), out.shape
    assert bool(jnp.all(jnp.abs(jnp.sum(out, axis=1) - 1.0) < 1e-3))
    print("KERNEL_OK")
</pallas_src>

<mosaic_0001>
module attributes {stable_mosaic.version = 11 : i64} {
  func.func @_matmul_bias_relu6_kernel(%arg0: i32, %arg1: memref<128x128xbf16, #tpu.memory_space<vmem>>, %arg2: memref<128x128xbf16, #tpu.memory_space<vmem>>, %arg3: memref<1x128xf32, #tpu.memory_space<vmem>>, %arg4: memref<128x128xbf16, #tpu.memory_space<vmem>>) attributes {dimension_semantics = [#tpu.dimension_semantics<parallel>], iteration_bounds = array<i64: 1>, scalar_prefetch = 0 : i64, scratch_operands = 0 : i64, tpu.core_type = #tpu.core_type<tc>, window_params = [{transform_indices = @transform_0, window_bounds = array<i64: 128, 128>}, {pipeline_mode = #tpu.pipeline_mode<synchronous>, transform_indices = @transform_1, window_bounds = array<i64: 128, 128>}, {pipeline_mode = #tpu.pipeline_mode<synchronous>, transform_indices = @transform_2, window_bounds = array<i64: 1, 128>}, {transform_indices = @transform_3, window_bounds = array<i64: 128, 128>}]} {
    %c0 = arith.constant 0 : index
    %c0_0 = arith.constant 0 : index
    %0 = vector.load %arg1[%c0, %c0_0] : memref<128x128xbf16, #tpu.memory_space<vmem>>, vector<128x128xbf16>
    %c0_1 = arith.constant 0 : index
    %c0_2 = arith.constant 0 : index
    %1 = vector.load %arg2[%c0_1, %c0_2] : memref<128x128xbf16, #tpu.memory_space<vmem>>, vector<128x128xbf16>
    %cst = arith.constant dense<0.000000e+00> : vector<128x128xf32>
    %2 = tpu.matmul %0, %1, %cst {dimension_numbers = #tpu.dot_dimension_numbers<[1], [0], [0], [1], [0, 0, 1, 1], [], []>} : vector<128x128xbf16>, vector<128x128xbf16>, vector<128x128xf32> -> vector<128x128xf32>
    %c0_3 = arith.constant 0 : index
    %c0_4 = arith.constant 0 : index
    %3 = vector.load %arg3[%c0_3, %c0_4] : memref<1x128xf32, #tpu.memory_space<vmem>>, vector<1x128xf32>
    %4 = vector.broadcast %3 : vector<1x128xf32> to vector<128x128xf32>
    %5 = arith.addf %2, %4 : vector<128x128xf32>
    %cst_5 = arith.constant 0.000000e+00 : f32
    %cst_6 = arith.constant 6.000000e+00 : f32
    %6 = vector.broadcast %cst_5 : f32 to vector<128x128xf32>
    %7 = arith.maximumf %6, %5 : vector<128x128xf32>
    %8 = vector.broadcast %cst_6 : f32 to vector<128x128xf32>
    %9 = arith.minimumf %8, %7 : vector<128x128xf32>
    %10 = arith.truncf %9 : vector<128x128xf32> to vector<128x128xbf16>
    %c0_7 = arith.constant 0 : index
    %c0_8 = arith.constant 0 : index
    %11 = vector.load %arg4[%c0_7, %c0_8] : memref<128x128xbf16, #tpu.memory_space<vmem>>, vector<128x128xbf16>
    tpu.vector_store %arg4[%c0_7, %c0_8], %10 {strides = array<i32>} : memref<128x128xbf16, #tpu.memory_space<vmem>>, vector<128x128xbf16>,
    return
  }
  func.func @transform_0(%arg0: i32) -> (i32, i32) {
    %c0_i32 = arith.constant 0 : i32
    %c0_i32_0 = arith.constant 0 : i32
    return %arg0, %c0_i32 : i32, i32
  }
  func.func @transform_1(%arg0: i32) -> (i32, i32) {
    %c0_i32 = arith.constant 0 : i32
    %c0_i32_0 = arith.constant 0 : i32
    %c0_i32_1 = arith.constant 0 : i32
    return %c0_i32, %c0_i32_0 : i32, i32
  }
  func.func @transform_2(%arg0: i32) -> (i32, i32) {
    %c0_i32 = arith.constant 0 : i32
    %c0_i32_0 = arith.constant 0 : i32
    %c0_i32_1 = arith.constant 0 : i32
    return %c0_i32, %c0_i32_0 : i32, i32
  }
  func.func @transform_3(%arg0: i32) -> (i32, i32) {
    %c0_i32 = arith.constant 0 : i32
    %c0_i32_0 = arith.constant 0 : i32
    return %arg0, %c0_i32 : i32, i32
  }
}

</mosaic_0001>

<llo_original>
// kernel: tpu_custom_call.1
$region0: #{tpu_custom_call.1}
  #allocation0 [shape = 'u32[]', space=smem, size = 0x4, offset = 0x4, fixed_abs, tag = 'smem constant byte address 0x4 - core index']
  #allocation1 [shape = 'u32[72,128]{1,0:T(1,128)}', space=vmem, size = 0x9000, scoped, tag = 'internal scratch']
  %s0 = inlined_call_operand.hbm [shape: bf16[128,128], index: 0, kind: input, shape index: {}]
  %s1 = inlined_call_operand.hbm [shape: bf16[128,128], index: 1, kind: input, shape index: {}]
  %s2 = inlined_call_operand.vmem [shape: f32[1,128], index: 2, kind: input, shape index: {}]
  %s3 = inlined_call_operand.hbm [shape: bf16[128,128], index: 3, kind: output, shape index: {}]
  %s4 = sld [smem:[#allocation0]]
  $region30: #{tpu_custom_call.1} parent=0
    _
  %s6 = ssub.s32 1, %s4
  %s7 = scalar_select 0, %s6, %s4
  $region1: #{tpu_custom_call.1} parent=0
    #allocation2 [shape = 'u8[32768]{0}', space=vmem, size = 0x8000, scoped, tag = 'input window, operand 0, single buffered']
    #allocation3 [shape = 's32[1]{0}', space=sflag, size = 0x4, scoped, tag = 'scoped memory for tpu_custom_call.1']
    #allocation4 [shape = 's32[1]{0}', space=sflag, size = 0x4, scoped, tag = 'scoped memory for tpu_custom_call.1']
    #allocation5 [shape = 'u8[32768]{0}', space=vmem, size = 0x8000, scoped, tag = 'input window, operand 1, single buffered']
    #allocation6 [shape = 's32[1]{0}', space=sflag, size = 0x4, scoped, tag = 'scoped memory for tpu_custom_call.1']
    #allocation7 [shape = 'u8[32768]{0}', space=vmem, size = 0x8000, scoped, tag = 'output window, operand 0, single buffered']
    %8 = vsyncpa [#allocation3], 0
    %9 = vsyncpa [#allocation6], 0
    %10 = vsyncpa [#allocation4], 0
    // Predicated region
    $region2: #{tpu_custom_call.1} parent=1 // pred_check
      _
    $region3: #{tpu_custom_call.1} parent=1 // pred_check_branch
      %12 = sbr.rel (0) target = $region5
    $region4: #{tpu_custom_call.1} parent=1 // pred_region
      %14 = vsyncadd [#allocation3], 0
      %s15 = sshll.u32 %s0, 4
      %s16 = int_to_ptr.hbm [resolvable:$true] %s15
      %s17 = sshll.u32 [#allocation2], 4
      %s18 = int_to_ptr.vmem [resolvable:$true] %s17
      %23 = dma.hbm_to_vmem [thread:$0]  %s16, 1024, %s18, [#allocation3], 64, 64, 4
    $region5: #{tpu_custom_call.1} parent=1 // pred_fallthru
      _
    // Predicated region
    $region6: #{tpu_custom_call.1} parent=1 // pred_check
      _
    $region7: #{tpu_custom_call.1} parent=1 // pred_check_branch
      %25 = sbr.rel (0) target = $region9
    $region8: #{tpu_custom_call.1} parent=1 // pred_region
      %27 = vsyncadd [#allocation6], 0
      %s28 = sshll.u32 %s1, 4
      %s29 = int_to_ptr.hbm [resolvable:$true] %s28
      %s30 = sshll.u32 [#allocation5], 4
      %s31 = int_to_ptr.vmem [resolvable:$true] %s30
      %36 = dma.hbm_to_vmem [thread:$0]  %s29, 1024, %s31, [#allocation6], 64, 64, 4
    $region9: #{tpu_custom_call.1} parent=1 // pred_fallthru
      _
    // Predicated region
    $region10: #{tpu_custom_call.1} parent=1 // pred_check
      _
    $region11: #{tpu_custom_call.1} parent=1 // pred_check_branch
      %38 = sbr.rel (0) target = $region13
    $region12: #{tpu_custom_call.1} parent=1 // pred_region
      _
    $region13: #{tpu_custom_call.1} parent=1 // pred_fallthru
      _
    // Predicated region
    $region14: #{tpu_custom_call.1} parent=1 // pred_check
      _
    $region15: #{tpu_custom_call.1} parent=1 // pred_check_branch
      %40 = sbr.rel (0) target = $region17
    $region16: #{tpu_custom_call.1} parent=1 // pred_region
      %42 = dma.done [#allocation3], 1024
    $region17: #{tpu_custom_call.1} parent=1 // pred_fallthru
      _
    // Predicated region
    $region18: #{tpu_custom_call.1} parent=1 // pred_check
      _
    $region19: #{tpu_custom_call.1} parent=1 // pred_check_branch
      %44 = sbr.rel (0) target = $region21
    $region20: #{tpu_custom_call.1} parent=1 // pred_region
      %46 = dma.done [#allocation6], 1024
    $region21: #{tpu_custom_call.1} parent=1 // pred_fallthru
      _
    %v47 = vld [vmem:[#allocation2] sm:$0xf]
    %v48 = vld [vmem:[#allocation2 + $0x4] sm:$0xf]
    %v49 = vld [vmem:[#allocation2 + $0x8] sm:$0xf]
    %v50 = vld [vmem:[#allocation2 + $0xc] sm:$0xf]
    %v51 = vld [vmem:[#allocation2 + $0x10] sm:$0xf]
    %v52 = vld [vmem:[#allocation2 + $0x14] sm:$0xf]
    %v53 = vld [vmem:[#allocation2 + $0x18] sm:$0xf]
    %v54 = vld [vmem:[#allocation2 + $0x1c] sm:$0xf]
    %v55 = vld [vmem:[#allocation2 + $0x20] sm:$0xf]
    %v56 = vld [vmem:[#allocation2 + $0x24] sm:$0xf]
    %v57 = vld [vmem:[#allocation2 + $0x28] sm:$0xf]
    %v58 = vld [vmem:[#allocation2 + $0x2c] sm:$0xf]
    %v59 = vld [vmem:[#allocation2 + $0x30] sm:$0xf]
    %v60 = vld [vmem:[#allocation2 + $0x34] sm:$0xf]
    %v61 = vld [vmem:[#allocation2 + $0x38] sm:$0xf]
    %v62 = vld [vmem:[#allocation2 + $0x3c] sm:$0xf]
    %v63 = vld [vmem:[#allocation5] sm:$0xf]
    %v64 = vld [vmem:[#allocation5 + $0x4] sm:$0xf]
    %v65 = vld [vmem:[#allocation5 + $0x8] sm:$0xf]
    %v66 = vld [vmem:[#allocation5 + $0xc] sm:$0xf]
    %v67 = vld [vmem:[#allocation5 + $0x10] sm:$0xf]
    %v68 = vld [vmem:[#allocation5 + $0x14] sm:$0xf]
    %v69 = vld [vmem:[#allocation5 + $0x18] sm:$0xf]
    %v70 = vld [vmem:[#allocation5 + $0x1c] sm:$0xf]
    %v71 = vld [vmem:[#allocation5 + $0x20] sm:$0xf]
    %v72 = vld [vmem:[#allocation5 + $0x24] sm:$0xf]
    %v73 = vld [vmem:[#allocation5 + $0x28] sm:$0xf]
    %v74 = vld [vmem:[#allocation5 + $0x2c] sm:$0xf]
    %v75 = vld [vmem:[#allocation5 + $0x30] sm:$0xf]
    %v76 = vld [vmem:[#allocation5 + $0x34] sm:$0xf]
    %v77 = vld [vmem:[#allocation5 + $0x38] sm:$0xf]
    %v78 = vld [vmem:[#allocation5 + $0x3c] sm:$0xf]
    %v79 = vld [vmem:[%s2] sm:$0x1]
    %v81 = vperm.slane %v79, 0
    %v99 = vunpack.c.l.b16 %v47
    %v100 = vunpack.c.l.b16 %v48
    %v101 = vunpack.c.l.b16 %v49
    %v102 = vunpack.c.l.b16 %v50
    %v103 = vunpack.c.l.b16 %v51
    %v104 = vunpack.c.l.b16 %v52
    %v105 = vunpack.c.l.b16 %v53
    %v106 = vunpack.c.l.b16 %v54
    %v107 = vunpack.c.l.b16 %v55
    %v108 = vunpack.c.l.b16 %v56
    %v109 = vunpack.c.l.b16 %v57
    %v110 = vunpack.c.l.b16 %v58
    %v111 = vunpack.c.l.b16 %v59
    %v112 = vunpack.c.l.b16 %v60
    %v113 = vunpack.c.l.b16 %v61
    %v114 = vunpack.c.l.b16 %v62
    %v115 = vpack.c.b16 %v100, %v99
    %v116 = vpack.c.b16 %v102, %v101
    %v117 = vpack.c.b16 %v104, %v103
    %v118 = vpack.c.b16 %v106, %v105
    %v119 = vpack.c.b16 %v108, %v107
    %v120 = vpack.c.b16 %v110, %v109
    %v121 = vpack.c.b16 %v112, %v111
    %v122 = vpack.c.b16 %v114, %v113
    %v147 = vunpack.c.l.b16 %v63
    %v148 = vunpack.c.l.b16 %v64
    %v149 = vunpack.c.l.b16 %v65
    %v150 = vunpack.c.l.b16 %v66
    %v151 = vunpack.c.l.b16 %v67
    %v152 = vunpack.c.l.b16 %v68
    %v153 = vunpack.c.l.b16 %v69
    %v154 = vunpack.c.l.b16 %v70
    %v155 = vunpack.c.l.b16 %v71
    %v156 = vunpack.c.l.b16 %v72
    %v157 = vunpack.c.l.b16 %v73
    %v158 = vunpack.c.l.b16 %v74
    %v159 = vunpack.c.l.b16 %v75
    %v160 = vunpack.c.l.b16 %v76
    %v161 = vunpack.c.l.b16 %v77
    %v162 = vunpack.c.l.b16 %v78
    %v163 = vpack.c.b16 %v148, %v147
    %v164 = vpack.c.b16 %v150, %v149
    %v165 = vpack.c.b16 %v152, %v151
    %v166 = vpack.c.b16 %v154, %v153
    %v167 = vpack.c.b16 %v156, %v155
    %v168 = vpack.c.b16 %v158, %v157
    %v169 = vpack.c.b16 %v160, %v159
    %v170 = vpack.c.b16 %v162, %v161
    %179 = vmatpush.bf16.msra.mxu0 %v170
    %180 = vmatpush.bf16.msra.mxu0 %v169
    %181 = vmatpush.bf16.msra.mxu0 %v168
    %182 = vmatpush.bf16.msra.mxu0 %v167
    %183 = vmatpush.bf16.msra.mxu0 %v166
    %184 = vmatpush.bf16.msra.mxu0 %v165
    %185 = vmatpush.bf16.msra.mxu0 %v164
    %186 = vmatpush.bf16.msra.mxu0 %v163
    %187 = vmatmul.bf16.gmra.mxu0 %v115
    %v188 = vpop.f32.mrf.mxu0
    %v189 = vadd.f32 %v81, %v188
    %v190 = vpop.f32.mrf.mxu0
    %v191 = vadd.f32 %v81, %v190
    %192 = vmatmul.bf16.gmra.mxu0 %v116
    %v193 = vpop.f32.mrf.mxu0
    %v194 = vadd.f32 %v81, %v193
    %v195 = vpop.f32.mrf.mxu0
    %v196 = vadd.f32 %v81, %v195
    %197 = vmatmul.bf16.gmra.mxu0 %v117
    %v198 = vpop.f32.mrf.mxu0
    %v199 = vadd.f32 %v81, %v198
    %v200 = vpop.f32.mrf.mxu0
    %v201 = vadd.f32 %v81, %v200
    %202 = vmatmul.bf16.gmra.mxu0 %v118
    %v203 = vpop.f32.mrf.mxu0
    %v204 = vadd.f32 %v81, %v203
    %v205 = vpop.f32.mrf.mxu0
    %v206 = vadd.f32 %v81, %v205
    %207 = vmatmul.bf16.gmra.mxu0 %v119
    %v208 = vpop.f32.mrf.mxu0
    %v209 = vadd.f32 %v81, %v208
    %v210 = vpop.f32.mrf.mxu0
    %v211 = vadd.f32 %v81, %v210
    %212 = vmatmul.bf16.gmra.mxu0 %v120
    %v213 = vpop.f32.mrf.mxu0
    %v214 = vadd.f32 %v81, %v213
    %v215 = vpop.f32.mrf.mxu0
    %v216 = vadd.f32 %v81, %v215
    %217 = vmatmul.bf16.gmra.mxu0 %v121
    %v218 = vpop.f32.mrf.mxu0
    %v219 = vadd.f32 %v81, %v218
    %v220 = vpop.f32.mrf.mxu0
    %v221 = vadd.f32 %v81, %v220
    %222 = vmatmul.bf16.gmra.mxu0 %v122
    %v223 = vpop.f32.mrf.mxu0
    %v224 = vadd.f32 %v81, %v223
    %v225 = vpop.f32.mrf.mxu0
    %v226 = vadd.f32 %v81, %v225
    %227 = vdwg.mxu0
    %v228 = vmax.f32 %v189, 0.0
    %v229 = vmax.f32 %v191, 0.0
    %v230 = vmax.f32 %v194, 0.0
    %v231 = vmax.f32 %v196, 0.0
    %v232 = vmax.f32 %v199, 0.0
    %v233 = vmax.f32 %v201, 0.0
    %v234 = vmax.f32 %v204, 0.0
    %v235 = vmax.f32 %v206, 0.0
    %v236 = vmax.f32 %v209, 0.0
    %v237 = vmax.f32 %v211, 0.0
    %v238 = vmax.f32 %v214, 0.0
    %v239 = vmax.f32 %v216, 0.0
    %v240 = vmax.f32 %v219, 0.0
    %v241 = vmax.f32 %v221, 0.0
    %v242 = vmax.f32 %v224, 0.0
    %v243 = vmax.f32 %v226, 0.0
    %v244 = vmin.f32 %v228, 6.0
    %v245 = vmin.f32 %v229, 6.0
    %v246 = vmin.f32 %v230, 6.0
    %v247 = vmin.f32 %v231, 6.0
    %v248 = vmin.f32 %v232, 6.0
    %v249 = vmin.f32 %v233, 6.0
    %v250 = vmin.f32 %v234, 6.0
    %v251 = vmin.f32 %v235, 6.0
    %v252 = vmin.f32 %v236, 6.0
    %v253 = vmin.f32 %v237, 6.0
    %v254 = vmin.f32 %v238, 6.0
    %v255 = vmin.f32 %v239, 6.0
    %v256 = vmin.f32 %v240, 6.0
    %v257 = vmin.f32 %v241, 6.0
    %v258 = vmin.f32 %v242, 6.0
    %v259 = vmin.f32 %v243, 6.0
    %v260 = vpack.c.bf16 %v244, %v244
    %v261 = vpack.c.bf16 %v245, %v245
    %v262 = vpack.c.bf16 %v246, %v246
    %v263 = vpack.c.bf16 %v247, %v247
    %v264 = vpack.c.bf16 %v248, %v248
    %v265 = vpack.c.bf16 %v249, %v249
    %v266 = vpack.c.bf16 %v250, %v250
    %v267 = vpack.c.bf16 %v251, %v251
    %v268 = vpack.c.bf16 %v252, %v252
    %v269 = vpack.c.bf16 %v253, %v253
    %v270 = vpack.c.bf16 %v254, %v254
    %v271 = vpack.c.bf16 %v255, %v255
    %v272 = vpack.c.bf16 %v256, %v256
    %v273 = vpack.c.bf16 %v257, %v257
    %v274 = vpack.c.bf16 %v258, %v258
    %v275 = vpack.c.bf16 %v259, %v259
    %276 = vst [vmem:[#allocation7] sm:$0xf] %v260
    %277 = vst [vmem:[#allocation7 + $0x4] sm:$0xf] %v261
    %278 = vst [vmem:[#allocation7 + $0x8] sm:$0xf] %v262
    %279 = vst [vmem:[#allocation7 + $0xc] sm:$0xf] %v263
    %280 = vst [vmem:[#allocation7 + $0x10] sm:$0xf] %v264
    %281 = vst [vmem:[#allocation7 + $0x14] sm:$0xf] %v265
    %282 = vst [vmem:[#allocation7 + $0x18] sm:$0xf] %v266
    %283 = vst [vmem:[#allocation7 + $0x1c] sm:$0xf] %v267
    %284 = vst [vmem:[#allocation7 + $0x20] sm:$0xf] %v268
    %285 = vst [vmem:[#allocation7 + $0x24] sm:$0xf] %v269
    %286 = vst [vmem:[#allocation7 + $0x28] sm:$0xf] %v270
    %287 = vst [vmem:[#allocation7 + $0x2c] sm:$0xf] %v271
    %288 = vst [vmem:[#allocation7 + $0x30] sm:$0xf] %v272
    %289 = vst [vmem:[#allocation7 + $0x34] sm:$0xf] %v273
    %290 = vst [vmem:[#allocation7 + $0x38] sm:$0xf] %v274
    %291 = vst [vmem:[#allocation7 + $0x3c] sm:$0xf] %v275
    // Predicated region
    $region22: #{tpu_custom_call.1} parent=1 // pred_check
      _
    $region23: #{tpu_custom_call.1} parent=1 // pred_check_branch
      %293 = sbr.rel (0) target = $region25
    $region24: #{tpu_custom_call.1} parent=1 // pred_region
      %295 = vsyncadd [#allocation4], 0
      %s296 = sshll.u32 [#allocation7], 4
      %s297 = int_to_ptr.vmem [resolvable:$true] %s296
      %s298 = sshll.u32 %s3, 4
      %s299 = int_to_ptr.hbm [resolvable:$true] %s298
      %304 = dma.vmem_to_hbm [thread:$0]  %s297, 1024, %s299, [#allocation4], 64, 64, 4
    $region25: #{tpu_custom_call.1} parent=1 // pred_fallthru
      _
    // Predicated region
    $region26: #{tpu_custom_call.1} parent=1 // pred_check
      _
    $region27: #{tpu_custom_call.1} parent=1 // pred_check_branch
      %306 = sbr.rel (0) target = $region29
    $region28: #{tpu_custom_call.1} parent=1 // pred_region
      %308 = dma.done [#allocation4], 1024
    $region29: #{tpu_custom_call.1} parent=1 // pred_fallthru
      _
    %309 = vsyncpa [#allocation3], 1
    %310 = vsyncpa [#allocation6], 1
    %311 = vsyncpa [#allocation4], 1

</llo_original>
